<compile_context>
chip_gen: v6e
topology: v6e:2x2x1
jax: 0.10.0
libtpu: 0.0.40
codegen_flags: <defaults>
</compile_context>

<pallas_src>
import functools

import jax
import jax.numpy as jnp
from jax import lax
from jax.experimental import pallas as pl
from jax.experimental.pallas import tpu as pltpu


def _attn_kernel(x_ref, qkv_w_ref, out_w_ref, out_b_ref, o_ref, *,
                 heads, dim_head, scale):
    x = x_ref[0]                                                 # (N, D)
    inner = heads * dim_head

    # Fused QKV projection: one MXU matmul, lane-dense result (3*H*dh lanes).
    qkv = jnp.dot(x, qkv_w_ref[...],
                  preferred_element_type=jnp.float32)            # (N, 3*H*dh)

    # Per-head attention, statically unrolled (H is small and known).
    head_outs = []
    for h in range(heads):
        lo = h * dim_head
        hi = lo + dim_head
        q = qkv[:, lo:hi]                                        # (N, dh)
        k = qkv[:, inner + lo:inner + hi]                        # (N, dh)
        v = qkv[:, 2 * inner + lo:2 * inner + hi]                # (N, dh)

        # q @ k^T via dot_general contracting on dh (no explicit transpose).
        dots = lax.dot_general(
            q, k,
            dimension_numbers=(((1,), (1,)), ((), ())),
            preferred_element_type=jnp.float32,
        ) * scale                                                # (N, N)

        dots = dots - jnp.max(dots, axis=-1, keepdims=True)
        e = jnp.exp(dots)
        attn = e / jnp.sum(e, axis=-1, keepdims=True)
        # TODO(synk): dropout omitted (p=0.0 in module defaults → identity)

        head_outs.append(
            jnp.dot(attn, v, preferred_element_type=jnp.float32))  # (N, dh)

    out_cat = jnp.concatenate(head_outs, axis=-1)                # (N, H*dh)

    # Fused output projection: one MXU matmul + bias.
    out = jnp.dot(out_cat, out_w_ref[...],
                  preferred_element_type=jnp.float32)            # (N, D)
    out = out + out_b_ref[...]                                   # broadcast (1, D)

    o_ref[...] = out[None, :, :].astype(o_ref.dtype)


def attention_pallas(x, qkv_w, out_w, out_b, *, heads, dim_head, scale):
    """x: (B, N, D), qkv_w: (D, 3*H*dh), out_w: (H*dh, D), out_b: (1, D)."""
    B, N, D = x.shape
    inner = heads * dim_head
    assert qkv_w.shape == (D, 3 * inner)
    assert out_w.shape == (inner, D)

    kernel = functools.partial(_attn_kernel,
                               heads=heads, dim_head=dim_head, scale=scale)

    return pl.pallas_call(
        kernel,
        out_shape=jax.ShapeDtypeStruct((B, N, D), jnp.float32),
        grid_spec=pltpu.PrefetchScalarGridSpec(
            num_scalar_prefetch=0,
            grid=(B,),
            in_specs=[
                pl.BlockSpec((1, N, D), lambda b: (b, 0, 0)),          # x (per batch)
                pl.BlockSpec((D, 3 * inner), lambda b: (0, 0)),        # qkv_w (once)
                pl.BlockSpec((inner, D), lambda b: (0, 0)),            # out_w (once)
                pl.BlockSpec((1, D), lambda b: (0, 0)),                # out_b (once)
            ],
            out_specs=pl.BlockSpec((1, N, D), lambda b: (b, 0, 0)),
        ),
        compiler_params=pltpu.CompilerParams(
            dimension_semantics=("parallel",),                          # v7x: 2 TCs
        ),
    )(x, qkv_w, out_w, out_b)


def attention_reference(x, qkv_w, out_w, out_b, *, heads, scale):
    """Pure-JAX reference matching the PyTorch forward."""
    B, N, D = x.shape
    inner = qkv_w.shape[1] // 3
    dh = inner // heads

    qkv = jnp.einsum("bnd,de->bne", x, qkv_w)                    # (B, N, 3*inner)
    q, k, v = jnp.split(qkv, 3, axis=-1)

    def to_heads(t):
        return t.reshape(B, N, heads, dh).transpose(0, 2, 1, 3)  # (B, H, N, dh)

    q, k, v = map(to_heads, (q, k, v))
    dots = jnp.einsum("bhqe,bhke->bhqk", q, k) * scale
    attn = jax.nn.softmax(dots, axis=-1)
    out = jnp.einsum("bhqk,bhke->bhqe", attn, v)                 # (B, H, N, dh)
    out = out.transpose(0, 2, 1, 3).reshape(B, N, inner)
    return out @ out_w + out_b


if __name__ == "__main__":
    # Small shapes consistent with the module: dim=32, heads=4, dim_head=16
    B, N, D = 2, 8, 32
    H, DH = 4, 16
    INNER = H * DH
    scale = DH ** -0.5

    key = jax.random.PRNGKey(0)
    kx, kqkv, kw, kb = jax.random.split(key, 4)

    x = jax.random.normal(kx, (B, N, D), dtype=jnp.float32)

    # PyTorch parameter shapes: to_qkv.weight (3*inner, D), to_out[0].weight
    # (D, inner), to_out[0].bias (D,).  nn.Linear computes y = x @ W.T (+ b).
    w_qkv_pt = jax.random.normal(kqkv, (3 * INNER, D), dtype=jnp.float32) * 0.05
    w_out_pt = jax.random.normal(kw, (D, INNER), dtype=jnp.float32) * 0.05
    b_out_pt = jax.random.normal(kb, (D,), dtype=jnp.float32) * 0.05

    # Fused, lane-dense kernel weights.
    # x @ W_qkv.T has columns ordered (qkv=3, head=H, dh) — matches chunk(3)
    # followed by rearrange 'b n (h d)'.
    qkv_w = w_qkv_pt.T            # (D, 3*inner) = (32, 192)
    out_w = w_out_pt.T            # (inner, D)   = (64, 32), rows are (h, dh) h-major
    out_b = b_out_pt.reshape(1, D)

    y = attention_pallas(x, qkv_w, out_w, out_b,
                         heads=H, dim_head=DH, scale=scale)
    y = jax.block_until_ready(y)

    y_ref = attention_reference(x, qkv_w, out_w, out_b, heads=H, scale=scale)
    assert y.shape == (B, N, D)
    assert jnp.allclose(y, y_ref, atol=1e-4, rtol=1e-4), "mismatch vs reference"

    print("KERNEL_OK")
</pallas_src>

<mosaic_0001>
module attributes {stable_mosaic.version = 11 : i64} {
  func.func @_attn_kernel(%arg0: i32, %arg1: memref<1x8x32xf32, #tpu.memory_space<vmem>>, %arg2: memref<32x192xf32, #tpu.memory_space<vmem>>, %arg3: memref<64x32xf32, #tpu.memory_space<vmem>>, %arg4: memref<1x32xf32, #tpu.memory_space<vmem>>, %arg5: memref<1x8x32xf32, #tpu.memory_space<vmem>>) attributes {dimension_semantics = [#tpu.dimension_semantics<parallel>], iteration_bounds = array<i64: 2>, scalar_prefetch = 0 : i64, scratch_operands = 0 : i64, tpu.core_type = #tpu.core_type<tc>, window_params = [{transform_indices = @transform_0, window_bounds = array<i64: 1, 8, 32>}, {pipeline_mode = #tpu.pipeline_mode<synchronous>, transform_indices = @transform_1, window_bounds = array<i64: 32, 192>}, {pipeline_mode = #tpu.pipeline_mode<synchronous>, transform_indices = @transform_2, window_bounds = array<i64: 64, 32>}, {pipeline_mode = #tpu.pipeline_mode<synchronous>, transform_indices = @transform_3, window_bounds = array<i64: 1, 32>}, {transform_indices = @transform_4, window_bounds = array<i64: 1, 8, 32>}]} {
    %c0 = arith.constant 0 : index
    %c0_0 = arith.constant 0 : index
    %c0_1 = arith.constant 0 : index
    %0 = vector.load %arg1[%c0, %c0_0, %c0_1] : memref<1x8x32xf32, #tpu.memory_space<vmem>>, vector<1x8x32xf32>
    %1 = vector.shape_cast %0 : vector<1x8x32xf32> to vector<8x32xf32>
    %c0_2 = arith.constant 0 : index
    %c0_3 = arith.constant 0 : index
    %2 = vector.load %arg2[%c0_2, %c0_3] : memref<32x192xf32, #tpu.memory_space<vmem>>, vector<32x192xf32>
    %cst = arith.constant dense<0.000000e+00> : vector<8x192xf32>
    %3 = tpu.matmul %1, %2, %cst {dimension_numbers = #tpu.dot_dimension_numbers<[1], [0], [0], [1], [0, 0, 1, 1], [], []>} : vector<8x32xf32>, vector<32x192xf32>, vector<8x192xf32> -> vector<8x192xf32>
    %4 = vector.extract_strided_slice %3 {offsets = [0, 0], sizes = [8, 16], strides = [1, 1]} : vector<8x192xf32> to vector<8x16xf32>
    %5 = vector.extract_strided_slice %3 {offsets = [0, 64], sizes = [8, 16], strides = [1, 1]} : vector<8x192xf32> to vector<8x16xf32>
    %6 = vector.extract_strided_slice %3 {offsets = [0, 128], sizes = [8, 16], strides = [1, 1]} : vector<8x192xf32> to vector<8x16xf32>
    %cst_4 = arith.constant dense<0.000000e+00> : vector<8x8xf32>
    %7 = tpu.matmul %4, %5, %cst_4 {dimension_numbers = #tpu.dot_dimension_numbers<[1], [1], [0], [0], [0, 0, 1, 0], [], []>} : vector<8x16xf32>, vector<8x16xf32>, vector<8x8xf32> -> vector<8x8xf32>
    %cst_5 = arith.constant 2.500000e-01 : f32
    %8 = vector.broadcast %cst_5 : f32 to vector<8x8xf32>
    %9 = arith.mulf %7, %8 : vector<8x8xf32>
    %cst_6 = arith.constant dense<0xFF800000> : vector<8xf32>
    %10 = vector.multi_reduction <maximumf>, %9, %cst_6 [1] : vector<8x8xf32> to vector<8xf32>
    %11 = vector.shape_cast %10 : vector<8xf32> to vector<8x1xf32>
    %12 = vector.broadcast %11 : vector<8x1xf32> to vector<8x8xf32>
    %13 = arith.subf %9, %12 : vector<8x8xf32>
    %14 = math.exp %13 : vector<8x8xf32>
    %cst_7 = arith.constant dense<0.000000e+00> : vector<8xf32>
    %15 = vector.multi_reduction <add>, %14, %cst_7 [1] : vector<8x8xf32> to vector<8xf32>
    %16 = vector.shape_cast %15 : vector<8xf32> to vector<8x1xf32>
    %17 = vector.broadcast %16 : vector<8x1xf32> to vector<8x8xf32>
    %18 = arith.divf %14, %17 : vector<8x8xf32>
    %cst_8 = arith.constant dense<0.000000e+00> : vector<8x16xf32>
    %19 = tpu.matmul %18, %6, %cst_8 {dimension_numbers = #tpu.dot_dimension_numbers<[1], [0], [0], [1], [0, 0, 1, 1], [], []>} : vector<8x8xf32>, vector<8x16xf32>, vector<8x16xf32> -> vector<8x16xf32>
    %20 = vector.extract_strided_slice %3 {offsets = [0, 16], sizes = [8, 16], strides = [1, 1]} : vector<8x192xf32> to vector<8x16xf32>
    %21 = vector.extract_strided_slice %3 {offsets = [0, 80], sizes = [8, 16], strides = [1, 1]} : vector<8x192xf32> to vector<8x16xf32>
    %22 = vector.extract_strided_slice %3 {offsets = [0, 144], sizes = [8, 16], strides = [1, 1]} : vector<8x192xf32> to vector<8x16xf32>
    %cst_9 = arith.constant dense<0.000000e+00> : vector<8x8xf32>
    %23 = tpu.matmul %20, %21, %cst_9 {dimension_numbers = #tpu.dot_dimension_numbers<[1], [1], [0], [0], [0, 0, 1, 0], [], []>} : vector<8x16xf32>, vector<8x16xf32>, vector<8x8xf32> -> vector<8x8xf32>
    %cst_10 = arith.constant 2.500000e-01 : f32
    %24 = vector.broadcast %cst_10 : f32 to vector<8x8xf32>
    %25 = arith.mulf %23, %24 : vector<8x8xf32>
    %cst_11 = arith.constant dense<0xFF800000> : vector<8xf32>
    %26 = vector.multi_reduction <maximumf>, %25, %cst_11 [1] : vector<8x8xf32> to vector<8xf32>
    %27 = vector.shape_cast %26 : vector<8xf32> to vector<8x1xf32>
    %28 = vector.broadcast %27 : vector<8x1xf32> to vector<8x8xf32>
    %29 = arith.subf %25, %28 : vector<8x8xf32>
    %30 = math.exp %29 : vector<8x8xf32>
    %cst_12 = arith.constant dense<0.000000e+00> : vector<8xf32>
    %31 = vector.multi_reduction <add>, %30, %cst_12 [1] : vector<8x8xf32> to vector<8xf32>
    %32 = vector.shape_cast %31 : vector<8xf32> to vector<8x1xf32>
    %33 = vector.broadcast %32 : vector<8x1xf32> to vector<8x8xf32>
    %34 = arith.divf %30, %33 : vector<8x8xf32>
    %cst_13 = arith.constant dense<0.000000e+00> : vector<8x16xf32>
    %35 = tpu.matmul %34, %22, %cst_13 {dimension_numbers = #tpu.dot_dimension_numbers<[1], [0], [0], [1], [0, 0, 1, 1], [], []>} : vector<8x8xf32>, vector<8x16xf32>, vector<8x16xf32> -> vector<8x16xf32>
    %36 = vector.extract_strided_slice %3 {offsets = [0, 32], sizes = [8, 16], strides = [1, 1]} : vector<8x192xf32> to vector<8x16xf32>
    %37 = vector.extract_strided_slice %3 {offsets = [0, 96], sizes = [8, 16], strides = [1, 1]} : vector<8x192xf32> to vector<8x16xf32>
    %38 = vector.extract_strided_slice %3 {offsets = [0, 160], sizes = [8, 16], strides = [1, 1]} : vector<8x192xf32> to vector<8x16xf32>
    %cst_14 = arith.constant dense<0.000000e+00> : vector<8x8xf32>
    %39 = tpu.matmul %36, %37, %cst_14 {dimension_numbers = #tpu.dot_dimension_numbers<[1], [1], [0], [0], [0, 0, 1, 0], [], []>} : vector<8x16xf32>, vector<8x16xf32>, vector<8x8xf32> -> vector<8x8xf32>
    %cst_15 = arith.constant 2.500000e-01 : f32
    %40 = vector.broadcast %cst_15 : f32 to vector<8x8xf32>
    %41 = arith.mulf %39, %40 : vector<8x8xf32>
    %cst_16 = arith.constant dense<0xFF800000> : vector<8xf32>
    %42 = vector.multi_reduction <maximumf>, %41, %cst_16 [1] : vector<8x8xf32> to vector<8xf32>
    %43 = vector.shape_cast %42 : vector<8xf32> to vector<8x1xf32>
    %44 = vector.broadcast %43 : vector<8x1xf32> to vector<8x8xf32>
    %45 = arith.subf %41, %44 : vector<8x8xf32>
    %46 = math.exp %45 : vector<8x8xf32>
    %cst_17 = arith.constant dense<0.000000e+00> : vector<8xf32>
    %47 = vector.multi_reduction <add>, %46, %cst_17 [1] : vector<8x8xf32> to vector<8xf32>
    %48 = vector.shape_cast %47 : vector<8xf32> to vector<8x1xf32>
    %49 = vector.broadcast %48 : vector<8x1xf32> to vector<8x8xf32>
    %50 = arith.divf %46, %49 : vector<8x8xf32>
    %cst_18 = arith.constant dense<0.000000e+00> : vector<8x16xf32>
    %51 = tpu.matmul %50, %38, %cst_18 {dimension_numbers = #tpu.dot_dimension_numbers<[1], [0], [0], [1], [0, 0, 1, 1], [], []>} : vector<8x8xf32>, vector<8x16xf32>, vector<8x16xf32> -> vector<8x16xf32>
    %52 = vector.extract_strided_slice %3 {offsets = [0, 48], sizes = [8, 16], strides = [1, 1]} : vector<8x192xf32> to vector<8x16xf32>
    %53 = vector.extract_strided_slice %3 {offsets = [0, 112], sizes = [8, 16], strides = [1, 1]} : vector<8x192xf32> to vector<8x16xf32>
    %54 = vector.extract_strided_slice %3 {offsets = [0, 176], sizes = [8, 16], strides = [1, 1]} : vector<8x192xf32> to vector<8x16xf32>
    %cst_19 = arith.constant dense<0.000000e+00> : vector<8x8xf32>
    %55 = tpu.matmul %52, %53, %cst_19 {dimension_numbers = #tpu.dot_dimension_numbers<[1], [1], [0], [0], [0, 0, 1, 0], [], []>} : vector<8x16xf32>, vector<8x16xf32>, vector<8x8xf32> -> vector<8x8xf32>
    %cst_20 = arith.constant 2.500000e-01 : f32
    %56 = vector.broadcast %cst_20 : f32 to vector<8x8xf32>
    %57 = arith.mulf %55, %56 : vector<8x8xf32>
    %cst_21 = arith.constant dense<0xFF800000> : vector<8xf32>
    %58 = vector.multi_reduction <maximumf>, %57, %cst_21 [1] : vector<8x8xf32> to vector<8xf32>
    %59 = vector.shape_cast %58 : vector<8xf32> to vector<8x1xf32>
    %60 = vector.broadcast %59 : vector<8x1xf32> to vector<8x8xf32>
    %61 = arith.subf %57, %60 : vector<8x8xf32>
    %62 = math.exp %61 : vector<8x8xf32>
    %cst_22 = arith.constant dense<0.000000e+00> : vector<8xf32>
    %63 = vector.multi_reduction <add>, %62, %cst_22 [1] : vector<8x8xf32> to vector<8xf32>
    %64 = vector.shape_cast %63 : vector<8xf32> to vector<8x1xf32>
    %65 = vector.broadcast %64 : vector<8x1xf32> to vector<8x8xf32>
    %66 = arith.divf %62, %65 : vector<8x8xf32>
    %cst_23 = arith.constant dense<0.000000e+00> : vector<8x16xf32>
    %67 = tpu.matmul %66, %54, %cst_23 {dimension_numbers = #tpu.dot_dimension_numbers<[1], [0], [0], [1], [0, 0, 1, 1], [], []>} : vector<8x8xf32>, vector<8x16xf32>, vector<8x16xf32> -> vector<8x16xf32>
    %68 = tpu.concatenate %19, %35, %51, %67 in 1 : vector<8x16xf32>, vector<8x16xf32>, vector<8x16xf32>, vector<8x16xf32> -> vector<8x64xf32>
    %c0_24 = arith.constant 0 : index
    %c0_25 = arith.constant 0 : index
    %69 = vector.load %arg3[%c0_24, %c0_25] : memref<64x32xf32, #tpu.memory_space<vmem>>, vector<64x32xf32>
    %cst_26 = arith.constant dense<0.000000e+00> : vector<8x32xf32>
    %70 = tpu.matmul %68, %69, %cst_26 {dimension_numbers = #tpu.dot_dimension_numbers<[1], [0], [0], [1], [0, 0, 1, 1], [], []>} : vector<8x64xf32>, vector<64x32xf32>, vector<8x32xf32> -> vector<8x32xf32>
    %c0_27 = arith.constant 0 : index
    %c0_28 = arith.constant 0 : index
    %71 = vector.load %arg4[%c0_27, %c0_28] : memref<1x32xf32, #tpu.memory_space<vmem>>, vector<1x32xf32>
    %72 = vector.broadcast %71 : vector<1x32xf32> to vector<8x32xf32>
    %73 = arith.addf %70, %72 : vector<8x32xf32>
    %74 = vector.shape_cast %73 : vector<8x32xf32> to vector<1x8x32xf32>
    %c0_29 = arith.constant 0 : index
    %c0_30 = arith.constant 0 : index
    %c0_31 = arith.constant 0 : index
    %75 = vector.load %arg5[%c0_29, %c0_30, %c0_31] : memref<1x8x32xf32, #tpu.memory_space<vmem>>, vector<1x8x32xf32>
    tpu.vector_store %arg5[%c0_29, %c0_30, %c0_31], %74 {strides = array<i32>} : memref<1x8x32xf32, #tpu.memory_space<vmem>>, vector<1x8x32xf32>,
    return
  }
  func.func @transform_0(%arg0: i32) -> (i32, i32, i32) {
    %c0_i32 = arith.constant 0 : i32
    %c0_i32_0 = arith.constant 0 : i32
    %c0_i32_1 = arith.constant 0 : i32
    return %arg0, %c0_i32, %c0_i32_0 : i32, i32, i32
  }
  func.func @transform_1(%arg0: i32) -> (i32, i32) {
    %c0_i32 = arith.constant 0 : i32
    %c0_i32_0 = arith.constant 0 : i32
    %c0_i32_1 = arith.constant 0 : i32
    return %c0_i32, %c0_i32_0 : i32, i32
  }
  func.func @transform_2(%arg0: i32) -> (i32, i32) {
    %c0_i32 = arith.constant 0 : i32
    %c0_i32_0 = arith.constant 0 : i32
    %c0_i32_1 = arith.constant 0 : i32
    return %c0_i32, %c0_i32_0 : i32, i32
  }
  func.func @transform_3(%arg0: i32) -> (i32, i32) {
    %c0_i32 = arith.constant 0 : i32
    %c0_i32_0 = arith.constant 0 : i32
    %c0_i32_1 = arith.constant 0 : i32
    return %c0_i32, %c0_i32_0 : i32, i32
  }
  func.func @transform_4(%arg0: i32) -> (i32, i32, i32) {
    %c0_i32 = arith.constant 0 : i32
    %c0_i32_0 = arith.constant 0 : i32
    %c0_i32_1 = arith.constant 0 : i32
    return %arg0, %c0_i32, %c0_i32_0 : i32, i32, i32
  }
}

</mosaic_0001>

<llo_original>
// kernel: tpu_custom_call.1
$region0: #{tpu_custom_call.1}
  #allocation0 [shape = 'u32[]', space=smem, size = 0x4, offset = 0x4, fixed_abs, tag = 'smem constant byte address 0x4 - core index']
  #allocation1 [shape = 'u32[144,128]{1,0:T(1,128)}', space=vmem, size = 0x12000, scoped, tag = 'internal scratch']
  %s0 = inlined_call_operand.vmem [shape: f32[2,8,32], index: 0, kind: input, shape index: {}]
  %s1 = inlined_call_operand.vmem [shape: f32[32,192], index: 1, kind: input, shape index: {}]
  %s2 = inlined_call_operand.vmem [shape: f32[64,32], index: 2, kind: input, shape index: {}]
  %s3 = inlined_call_operand.vmem [shape: f32[1,32], index: 3, kind: input, shape index: {}]
  %s4 = inlined_call_operand.hbm [shape: f32[2,8,32], index: 4, kind: output, shape index: {}]
  %s5 = sld [smem:[#allocation0]]
  $region49: #{tpu_custom_call.1} parent=0
    _
  %s7 = ssub.s32 1, %s5
  %s8 = scalar_select 0, %s7, %s5
  $region1: #{tpu_custom_call.1} parent=0
    #allocation2 [shape = 'u8[8192]{0}', space=vmem, size = 0x2000, scoped, tag = 'output window, operand 0']
    #allocation3 [shape = 's32[2]{0}', space=sflag, size = 0x8, scoped, tag = 'scoped memory for tpu_custom_call.1']
    %9 = vsyncpa [#allocation3], 0
    %s10 = scalar_lea.sflag [#allocation3], 1
    %11 = vsyncpa %s10, 0
    loop: start=0, step=1, limit=4
    $region2: #{tpu_custom_call.1} parent=1 // loop_pre_header
      _
    $region3: #{tpu_custom_call.1} parent=1 // loop_header
      %s13 = sphi 0, %s17
      %p14 = scmp.ge.s32.totalorder %s13, 4
      %s23 = sphi 0, %s25
      %s26 = sphi 0, %s23
      %s27 = sphi 0, %s26
      %s43 = sphi 0, %s27
      %s47 = sphi 0, %s47
      %s49 = sphi 0, %s47
      %s50 = sphi 0, %s49
      %s64 = sphi 0, %s50
      %s68 = sphi 0, %s68
      %s70 = sphi 0, %s68
      %s71 = sphi 0, %s70
      %s85 = sphi 0, %s71
      %s89 = sphi 0, %s89
      %s91 = sphi 0, %s89
      %s92 = sphi 0, %s91
      %s106 = sphi 0, %s92
      %s112 = sphi 0, %s114
      %s115 = sphi 0, %s112
      %s116 = sphi 0, %s115
      %s132 = sphi 0, %s116
    $region4: #{tpu_custom_call.1} parent=1 // loop_header_branch
      %16 = sbr.rel (%p14) target = $region8
    $region5: #{tpu_custom_call.1} parent=1 // loop_body
      %s18 = ssub.s32 %s13, 1
      %s19 = ssub.s32 %s13, 2
      %s20 = sadd.s32 %s13, 1
      %s21 = ssub.s32 %s13, %s20
      %p22 = scmp.eq.s32.totalorder %s21, 0
      %s24 = sadd.s32 %s23, 1
      %s25 = scalar_select %p22, %s23, %s24
      %p28 = pneg %p22
      %p29 = scmp.eq.s32.totalorder %s13, 1
      %p30 = por %p28, %p29
      %p31 = scmp.ne.s32.totalorder %s23, %s26
      %p32 = scmp.eq.s32.totalorder %s13, 0
      %p33 = por %p31, %p32
      %p34 = scmp.ne.s32.totalorder %s23, %s26
      %p35 = scmp.eq.s32.totalorder %s18, 1
      %p36 = por %p34, %p35
      %p37 = scmp.ne.s32.totalorder %s26, %s27
      %p38 = scmp.eq.s32.totalorder %s18, 0
      %p39 = por %p37, %p38
      %p40 = scmp.ne.s32.totalorder %s26, %s27
      %p41 = scmp.eq.s32.totalorder %s19, 1
      %p42 = por %p40, %p41
      %p44 = scmp.ne.s32.totalorder %s27, %s43
      %p45 = scmp.eq.s32.totalorder %s19, 0
      %p46 = por %p44, %p45
      %s48 = sadd.s32 %s47, 1
      %p51 = scmp.eq.s32.totalorder %s13, 1
      %p52 = scmp.ne.s32.totalorder %s47, %s49
      %p53 = scmp.eq.s32.totalorder %s13, 0
      %p54 = por %p52, %p53
      %p55 = scmp.ne.s32.totalorder %s47, %s49
      %p56 = scmp.eq.s32.totalorder %s18, 1
      %p57 = por %p55, %p56
      %p58 = scmp.ne.s32.totalorder %s49, %s50
      %p59 = scmp.eq.s32.totalorder %s18, 0
      %p60 = por %p58, %p59
      %p61 = scmp.ne.s32.totalorder %s49, %s50
      %p62 = scmp.eq.s32.totalorder %s19, 1
      %p63 = por %p61, %p62
      %p65 = scmp.ne.s32.totalorder %s50, %s64
      %p66 = scmp.eq.s32.totalorder %s19, 0
      %p67 = por %p65, %p66
      %s69 = sadd.s32 %s68, 1
      %p72 = scmp.eq.s32.totalorder %s13, 1
      %p73 = scmp.ne.s32.totalorder %s68, %s70
      %p74 = scmp.eq.s32.totalorder %s13, 0
      %p75 = por %p73, %p74
      %p76 = scmp.ne.s32.totalorder %s68, %s70
      %p77 = scmp.eq.s32.totalorder %s18, 1
      %p78 = por %p76, %p77
      %p79 = scmp.ne.s32.totalorder %s70, %s71
      %p80 = scmp.eq.s32.totalorder %s18, 0
      %p81 = por %p79, %p80
      %p82 = scmp.ne.s32.totalorder %s70, %s71
      %p83 = scmp.eq.s32.totalorder %s19, 1
      %p84 = por %p82, %p83
      %p86 = scmp.ne.s32.totalorder %s71, %s85
      %p87 = scmp.eq.s32.totalorder %s19, 0
      %p88 = por %p86, %p87
      %s90 = sadd.s32 %s89, 1
      %p93 = scmp.eq.s32.totalorder %s13, 1
      %p94 = scmp.ne.s32.totalorder %s89, %s91
      %p95 = scmp.eq.s32.totalorder %s13, 0
      %p96 = por %p94, %p95
      %p97 = scmp.ne.s32.totalorder %s89, %s91
      %p98 = scmp.eq.s32.totalorder %s18, 1
      %p99 = por %p97, %p98
      %p100 = scmp.ne.s32.totalorder %s91, %s92
      %p101 = scmp.eq.s32.totalorder %s18, 0
      %p102 = por %p100, %p101
      %p103 = scmp.ne.s32.totalorder %s91, %s92
      %p104 = scmp.eq.s32.totalorder %s19, 1
      %p105 = por %p103, %p104
      %p107 = scmp.ne.s32.totalorder %s92, %s106
      %p108 = scmp.eq.s32.totalorder %s19, 0
      %p109 = por %p107, %p108
      %s110 = ssub.s32 %s13, %s20
      %p111 = scmp.eq.s32.totalorder %s110, 0
      %s113 = sadd.s32 %s112, 1
      %s114 = scalar_select %p111, %s112, %s113
      %p117 = pneg %p111
      %p118 = scmp.eq.s32.totalorder %s13, 1
      %p119 = por %p117, %p118
      %p120 = scmp.ne.s32.totalorder %s112, %s115
      %p121 = scmp.eq.s32.totalorder %s13, 0
      %p122 = por %p120, %p121
      %p123 = scmp.ne.s32.totalorder %s112, %s115
      %p124 = scmp.eq.s32.totalorder %s18, 1
      %p125 = por %p123, %p124
      %p126 = scmp.ne.s32.totalorder %s115, %s116
      %p127 = scmp.eq.s32.totalorder %s18, 0
      %p128 = por %p126, %p127
      %p129 = scmp.ne.s32.totalorder %s115, %s116
      %p130 = scmp.eq.s32.totalorder %s19, 1
      %p131 = por %p129, %p130
      %p133 = scmp.ne.s32.totalorder %s116, %s132
      %p134 = scmp.eq.s32.totalorder %s19, 0
      %p135 = por %p133, %p134
      %p136 = scmp.le.s32.totalorder 1, %s13
      %p137 = scmp.lt.s32.totalorder %s13, 3
      %p138 = pnand %p136, %p137
      %p139 = pneg %p138
      // Predicated region
      $region9: #{tpu_custom_call.1} parent=5 // pred_check
        _
      $region10: #{tpu_custom_call.1} parent=5 // pred_check_branch
        %141 = sbr.rel (%p138) target = $region12
      $region11: #{tpu_custom_call.1} parent=5 // pred_region
        %s142 = ssub.s32 %s13, 1
        // Predicated region
        $region13: #{tpu_custom_call.1} parent=11 // pred_check
          %p143 = pneg %p60
        $region14: #{tpu_custom_call.1} parent=11 // pred_check_branch
          %145 = sbr.rel (%p143) target = $region16
        $region15: #{tpu_custom_call.1} parent=11 // pred_region
          _
        $region16: #{tpu_custom_call.1} parent=11 // pred_fallthru
          _
        // Predicated region
        $region17: #{tpu_custom_call.1} parent=11 // pred_check
          %p146 = pneg %p81
        $region18: #{tpu_custom_call.1} parent=11 // pred_check_branch
          %148 = sbr.rel (%p146) target = $region20
        $region19: #{tpu_custom_call.1} parent=11 // pred_region
          _
        $region20: #{tpu_custom_call.1} parent=11 // pred_fallthru
          _
        // Predicated region
        $region21: #{tpu_custom_call.1} parent=11 // pred_check
          %p149 = pneg %p102
        $region22: #{tpu_custom_call.1} parent=11 // pred_check_branch
          %151 = sbr.rel (%p149) target = $region24
        $region23: #{tpu_custom_call.1} parent=11 // pred_region
          _
        $region24: #{tpu_custom_call.1} parent=11 // pred_fallthru
          _
      $region12: #{tpu_custom_call.1} parent=5 // pred_fallthru
        _
      %p152 = scmp.lt.s32.totalorder %s13, 2
      // Predicated region
      $region25: #{tpu_custom_call.1} parent=5 // pred_check
        %p153 = pneg %p152
      $region26: #{tpu_custom_call.1} parent=5 // pred_check_branch
        %155 = sbr.rel (%p153) target = $region28
      $region27: #{tpu_custom_call.1} parent=5 // pred_region
        // Predicated region
        $region29: #{tpu_custom_call.1} parent=27 // pred_check
          %p156 = pneg %p33
        $region30: #{tpu_custom_call.1} parent=27 // pred_check_branch
          %158 = sbr.rel (%p156) target = $region32
        $region31: #{tpu_custom_call.1} parent=27 // pred_region
          %p159 = scmp.lt.s32.totalorder %s13, 1
          %s160 = scalar_select %p159, %s13, 1
          %s161 = smul.addr %s160, 8
          %s162 = scalar_lea.vmem %s0, %s161
        $region32: #{tpu_custom_call.1} parent=27 // pred_fallthru
          _
      $region28: #{tpu_custom_call.1} parent=5 // pred_fallthru
        _
      %p163 = scmp.le.s32.totalorder 1, %s13
      %p164 = scmp.lt.s32.totalorder %s13, 3
      %p165 = pnand %p163, %p164
      %p166 = pneg %p165
      // Predicated region
      $region33: #{tpu_custom_call.1} parent=5 // pred_check
        _
      $region34: #{tpu_custom_call.1} parent=5 // pred_check_branch
        %168 = sbr.rel (%p165) target = $region36
      $region35: #{tpu_custom_call.1} parent=5 // pred_region
        %s169 = ssub.s32 %s13, 1
        %p170 = scmp.lt.s32.totalorder %s18, 1
        %s171 = scalar_select %p170, %s18, 1
        %s172 = smul.addr %s171, 8
        %s173 = scalar_lea.vmem %s0, %s172
        %p174 = pneg %p39
        %p175 = pneg %p36
        %p176 = pneg %p60
        %p177 = pneg %p57
        %p178 = pneg %p81
        %p179 = pneg %p78
        %p180 = pneg %p102
        %p181 = pneg %p99
        %p182 = pneg %p128
        %p183 = pneg %p125
        %s184 = sand.u32 %s115, 1
        %s185 = scalar_lea.sflag [#allocation3], %s184
        %s186 = sand.u32 %s115, 1
        %s187 = smul.addr %s186, 8
        %s188 = scalar_lea.vmem [#allocation2], %s187
        %p189 = scmp.lt.s32.totalorder %s18, 1
        %s190 = scalar_select %p189, %s18, 1
        %s191 = smul.addr %s190, 8
        %s192 = scalar_lea.vmem %s0, %s191
        %v193 = vld [vmem:[%s192] sm:$0xff]
        %v194 = vld [vmem:[%s1] sm:$0xff]
        %v195 = vld [vmem:[%s1 + $0x8] sm:$0xff]
        %v196 = vld [vmem:[%s1 + $0x10] sm:$0xff]
        %v197 = vld [vmem:[%s1 + $0x18] sm:$0xff]
        %v198 = vld [vmem:[%s1 + $0x20] sm:$0xff]
        %v199 = vld [vmem:[%s1 + $0x28] sm:$0xff]
        %v200 = vld [vmem:[%s1 + $0x30] sm:$0xff]
        %v201 = vld [vmem:[%s1 + $0x38] sm:$0xff]
        %vm202 = vcmask 261120
        %v204 = vsel %vm202, %v193, 0
        %206 = vmatprep.subr.mxu0 0.0
        %207 = vmatpush1.msra.mxu0 0.0
        %208 = vmatprep.subr.mxu0 0.0
        %209 = vmatpush1.msra.mxu0 0.0
        %210 = vmatprep.subr.mxu0 0.0
        %211 = vmatpush1.msra.mxu0 0.0
        %212 = vmatprep.subr.mxu0 0.0
        %213 = vmatpush1.msra.mxu0 0.0
        %214 = vmatprep.subr.mxu0 0.0
        %215 = vmatpush1.msra.mxu0 0.0
        %216 = vmatprep.subr.mxu0 0.0
        %217 = vmatpush1.msra.mxu0 0.0
        %218 = vmatprep.subr.mxu0 0.0
        %219 = vmatpush1.msra.mxu0 0.0
        %220 = vmatprep.subr.mxu0 0.0
        %221 = vmatpush1.msra.mxu0 0.0
        %222 = vmatprep.subr.mxu0 0.0
        %223 = vmatpush1.msra.mxu0 0.0
        %224 = vmatprep.subr.mxu0 0.0
        %225 = vmatpush1.msra.mxu0 0.0
        %226 = vmatprep.subr.mxu0 0.0
        %227 = vmatpush1.msra.mxu0 0.0
        %228 = vmatprep.subr.mxu0 0.0
        %229 = vmatpush1.msra.mxu0 0.0
        %230 = vmatprep.subr.mxu0 %v201
        %231 = vmatpush1.msra.mxu0 %v200
        %232 = vmatprep.subr.mxu0 %v199
        %233 = vmatpush1.msra.mxu0 %v198
        %234 = vmatprep.subr.mxu0 %v197
        %235 = vmatpush1.msra.mxu0 %v196
        %236 = vmatprep.subr.mxu0 %v195
        %237 = vmatpush1.msra.mxu0 %v194
        %238 = vmatprep.subr.mxu0 0.0
        %239 = vmatpush2.msra.mxu0 0.0
        %240 = vmatprep.subr.mxu0 0.0
        %241 = vmatpush2.msra.mxu0 0.0
        %242 = vmatprep.subr.mxu0 0.0
        %243 = vmatpush2.msra.mxu0 0.0
        %244 = vmatprep.subr.mxu0 0.0
        %245 = vmatpush2.msra.mxu0 0.0
        %246 = vmatprep.subr.mxu0 0.0
        %247 = vmatpush2.msra.mxu0 0.0
        %248 = vmatprep.subr.mxu0 0.0
        %249 = vmatpush2.msra.mxu0 0.0
        %250 = vmatprep.subr.mxu0 0.0
        %251 = vmatpush2.msra.mxu0 0.0
        %252 = vmatprep.subr.mxu0 0.0
        %253 = vmatpush2.msra.mxu0 0.0
        %254 = vmatprep.subr.mxu0 0.0
        %255 = vmatpush2.msra.mxu0 0.0
        %256 = vmatprep.subr.mxu0 0.0
        %257 = vmatpush2.msra.mxu0 0.0
        %258 = vmatprep.subr.mxu0 0.0
        %259 = vmatpush2.msra.mxu0 0.0
        %260 = vmatprep.subr.mxu0 0.0
        %261 = vmatpush2.msra.mxu0 0.0
        %262 = vmatprep.subr.mxu0 0.0
        %263 = vmatpush2.msra.mxu0 0.0
        %264 = vmatprep.subr.mxu0 0.0
        %265 = vmatpush2.msra.mxu0 0.0
        %266 = vmatprep.subr.mxu0 0.0
        %267 = vmatpush2.msra.mxu0 0.0
        %268 = vmatprep.subr.mxu0 0.0
        %269 = vmatpush2.msra.mxu0 0.0
        %270 = vmatprep.mubr.f32.mxu0 0.0
        %271 = vmatmul.mubr.f32.gmra.mxu0 %v204
        %v272 = vpop.f32.mrf.mxu0
        %v273 = vadd.f32 0.0, %v272
        %v274 = vpop.f32.mrf.mxu0
        %v275 = vadd.f32 0.0, %v274
        %276 = vdwg.mxu0
        %278 = vrot.lane.b32.xlu0 %v273, 64
        %v279 = vpop.permute.xlu0 %278
        %vm280 = vcmask 130048
        %v281 = vsel %vm280, %v273, 0
        %v283 = vsel %vm280, %v279, 0
        %285 = vmatprep.subr.mxu0 0.0
        %286 = vmatpush1.xpose.msra.mxu0 0.0
        %287 = vmatprep.subr.mxu0 0.0
        %288 = vmatpush1.xpose.msra.mxu0 0.0
        %289 = vmatprep.subr.mxu0 0.0
        %290 = vmatpush1.xpose.msra.mxu0 0.0
        %291 = vmatprep.subr.mxu0 0.0
        %292 = vmatpush1.xpose.msra.mxu0 0.0
        %293 = vmatprep.subr.mxu0 0.0
        %294 = vmatpush1.xpose.msra.mxu0 0.0
        %295 = vmatprep.subr.mxu0 0.0
        %296 = vmatpush1.xpose.msra.mxu0 0.0
        %297 = vmatprep.subr.mxu0 0.0
        %298 = vmatpush1.xpose.msra.mxu0 0.0
        %299 = vmatprep.subr.mxu0 0.0
        %300 = vmatpush1.xpose.msra.mxu0 0.0
        %301 = vmatprep.subr.mxu0 0.0
        %302 = vmatpush1.xpose.msra.mxu0 0.0
        %303 = vmatprep.subr.mxu0 0.0
        %304 = vmatpush1.xpose.msra.mxu0 0.0
        %305 = vmatprep.subr.mxu0 0.0
        %306 = vmatpush1.xpose.msra.mxu0 0.0
        %307 = vmatprep.subr.mxu0 0.0
        %308 = vmatpush1.xpose.msra.mxu0 0.0
        %309 = vmatprep.subr.mxu0 0.0
        %310 = vmatpush1.xpose.msra.mxu0 0.0
        %311 = vmatprep.subr.mxu0 0.0
        %312 = vmatpush1.xpose.msra.mxu0 0.0
        %313 = vmatprep.subr.mxu0 0.0
        %314 = vmatpush1.xpose.msra.mxu0 0.0
        %315 = vmatprep.subr.mxu0 0.0
        %316 = vmatpush1.xpose.msra.mxu0 %v283
        %317 = vmatprep.subr.mxu0 0.0
        %318 = vmatpush2.xpose.msra.mxu0 0.0
        %319 = vmatprep.subr.mxu0 0.0
        %320 = vmatpush2.xpose.msra.mxu0 0.0
        %321 = vmatprep.subr.mxu0 0.0
        %322 = vmatpush2.xpose.msra.mxu0 0.0
        %323 = vmatprep.subr.mxu0 0.0
        %324 = vmatpush2.xpose.msra.mxu0 0.0
        %325 = vmatprep.subr.mxu0 0.0
        %326 = vmatpush2.xpose.msra.mxu0 0.0
        %327 = vmatprep.subr.mxu0 0.0
        %328 = vmatpush2.xpose.msra.mxu0 0.0
        %329 = vmatprep.subr.mxu0 0.0
        %330 = vmatpush2.xpose.msra.mxu0 0.0
        %331 = vmatprep.subr.mxu0 0.0
        %332 = vmatpush2.xpose.msra.mxu0 0.0
        %333 = vmatprep.subr.mxu0 0.0
        %334 = vmatpush2.xpose.msra.mxu0 0.0
        %335 = vmatprep.subr.mxu0 0.0
        %336 = vmatpush2.xpose.msra.mxu0 0.0
        %337 = vmatprep.subr.mxu0 0.0
        %338 = vmatpush2.xpose.msra.mxu0 0.0
        %339 = vmatprep.subr.mxu0 0.0
        %340 = vmatpush2.xpose.msra.mxu0 0.0
        %341 = vmatprep.subr.mxu0 0.0
        %342 = vmatpush2.xpose.msra.mxu0 0.0
        %343 = vmatprep.subr.mxu0 0.0
        %344 = vmatpush2.xpose.msra.mxu0 0.0
        %345 = vmatprep.subr.mxu0 0.0
        %346 = vmatpush2.xpose.msra.mxu0 0.0
        %347 = vmatprep.subr.mxu0 0.0
        %348 = vmatpush2.xpose.msra.mxu0 0.0
        %349 = vmatprep.mubr.f32.mxu0 0.0
        %350 = vmatmul.mubr.f32.gmra.mxu0 %v281
        %v351 = vpop.f32.mrf.mxu0
        %v352 = vadd.f32 0.0, %v351
        %v353 = vpop.f32.mrf.mxu0
        %354 = vdwg.mxu0
        %v355 = vmul.f32 %v352, 0.25
        %vm356 = vcmask 64512
        %v357 = vsel %vm356, %v355, -inf
        %358 = vmax.xlane.f32.xlu0 %v357
        %v359 = vpop.xlane.xlu0 %358
        %v360 = vsub.f32 %v355, %v359
        %v361 = vmul.f32 %v360, 1.442695
        %v362 = vpow.pop %v361
        %v363 = vsel %vm356, %v362, 0.0
        %364 = vadd.xlane.f32.xlu0 %v363
        %v365 = vpop.xlane.xlu0 %364
        %v366 = vrcp.pop %v365
        %v367 = vmul.f32 %v362, %v366
        %v369 = vsel %vm356, %v367, 0
        %371 = vmatprep.subr.mxu0 0.0
        %372 = vmatpush1.msra.mxu0 0.0
        %373 = vmatprep.subr.mxu0 0.0
        %374 = vmatpush1.msra.mxu0 0.0
        %375 = vmatprep.subr.mxu0 0.0
        %376 = vmatpush1.msra.mxu0 0.0
        %377 = vmatprep.subr.mxu0 0.0
        %378 = vmatpush1.msra.mxu0 0.0
        %379 = vmatprep.subr.mxu0 0.0
        %380 = vmatpush1.msra.mxu0 0.0
        %381 = vmatprep.subr.mxu0 0.0
        %382 = vmatpush1.msra.mxu0 0.0
        %383 = vmatprep.subr.mxu0 0.0
        %384 = vmatpush1.msra.mxu0 0.0
        %385 = vmatprep.subr.mxu0 0.0
        %386 = vmatpush1.msra.mxu0 0.0
        %387 = vmatprep.subr.mxu0 0.0
        %388 = vmatpush1.msra.mxu0 0.0
        %389 = vmatprep.subr.mxu0 0.0
        %390 = vmatpush1.msra.mxu0 0.0
        %391 = vmatprep.subr.mxu0 0.0
        %392 = vmatpush1.msra.mxu0 0.0
        %393 = vmatprep.subr.mxu0 0.0
        %394 = vmatpush1.msra.mxu0 0.0
        %395 = vmatprep.subr.mxu0 0.0
        %396 = vmatpush1.msra.mxu0 0.0
        %397 = vmatprep.subr.mxu0 0.0
        %398 = vmatpush1.msra.mxu0 0.0
        %399 = vmatprep.subr.mxu0 0.0
        %400 = vmatpush1.msra.mxu0 0.0
        %401 = vmatprep.subr.mxu0 0.0
        %402 = vmatpush1.msra.mxu0 %v275
        %403 = vmatprep.subr.mxu0 0.0
        %404 = vmatpush2.msra.mxu0 0.0
        %405 = vmatprep.subr.mxu0 0.0
        %406 = vmatpush2.msra.mxu0 0.0
        %407 = vmatprep.subr.mxu0 0.0
        %408 = vmatpush2.msra.mxu0 0.0
        %409 = vmatprep.subr.mxu0 0.0
        %410 = vmatpush2.msra.mxu0 0.0
        %411 = vmatprep.subr.mxu0 0.0
        %412 = vmatpush2.msra.mxu0 0.0
        %413 = vmatprep.subr.mxu0 0.0
        %414 = vmatpush2.msra.mxu0 0.0
        %415 = vmatprep.subr.mxu0 0.0
        %416 = vmatpush2.msra.mxu0 0.0
        %417 = vmatprep.subr.mxu0 0.0
        %418 = vmatpush2.msra.mxu0 0.0
        %419 = vmatprep.subr.mxu0 0.0
        %420 = vmatpush2.msra.mxu0 0.0
        %421 = vmatprep.subr.mxu0 0.0
        %422 = vmatpush2.msra.mxu0 0.0
        %423 = vmatprep.subr.mxu0 0.0
        %424 = vmatpush2.msra.mxu0 0.0
        %425 = vmatprep.subr.mxu0 0.0
        %426 = vmatpush2.msra.mxu0 0.0
        %427 = vmatprep.subr.mxu0 0.0
        %428 = vmatpush2.msra.mxu0 0.0
        %429 = vmatprep.subr.mxu0 0.0
        %430 = vmatpush2.msra.mxu0 0.0
        %431 = vmatprep.subr.mxu0 0.0
        %432 = vmatpush2.msra.mxu0 0.0
        %433 = vmatprep.subr.mxu0 0.0
        %434 = vmatpush2.msra.mxu0 0.0
        %435 = vmatprep.mubr.f32.mxu0 0.0
        %436 = vmatmul.mubr.f32.gmra.mxu0 %v369
        %v437 = vpop.f32.mrf.mxu0
        %v438 = vadd.f32 0.0, %v437
        %v439 = vpop.f32.mrf.mxu0
        %440 = vdwg.mxu0
        %441 = vrot.lane.b32.xlu0 %v273, 112
        %v442 = vpop.permute.xlu0 %441
        %443 = vrot.lane.b32.xlu0 %v273, 48
        %v444 = vpop.permute.xlu0 %443
        %v445 = vsel %vm280, %v442, 0
        %v447 = vsel %vm280, %v444, 0
        %449 = vmatprep.subr.mxu0 0.0
        %450 = vmatpush1.xpose.msra.mxu0 0.0
        %451 = vmatprep.subr.mxu0 0.0
        %452 = vmatpush1.xpose.msra.mxu0 0.0
        %453 = vmatprep.subr.mxu0 0.0
        %454 = vmatpush1.xpose.msra.mxu0 0.0
        %455 = vmatprep.subr.mxu0 0.0
        %456 = vmatpush1.xpose.msra.mxu0 0.0
        %457 = vmatprep.subr.mxu0 0.0
        %458 = vmatpush1.xpose.msra.mxu0 0.0
        %459 = vmatprep.subr.mxu0 0.0
        %460 = vmatpush1.xpose.msra.mxu0 0.0
        %461 = vmatprep.subr.mxu0 0.0
        %462 = vmatpush1.xpose.msra.mxu0 0.0
        %463 = vmatprep.subr.mxu0 0.0
        %464 = vmatpush1.xpose.msra.mxu0 0.0
        %465 = vmatprep.subr.mxu0 0.0
        %466 = vmatpush1.xpose.msra.mxu0 0.0
        %467 = vmatprep.subr.mxu0 0.0
        %468 = vmatpush1.xpose.msra.mxu0 0.0
        %469 = vmatprep.subr.mxu0 0.0
        %470 = vmatpush1.xpose.msra.mxu0 0.0
        %471 = vmatprep.subr.mxu0 0.0
        %472 = vmatpush1.xpose.msra.mxu0 0.0
        %473 = vmatprep.subr.mxu0 0.0
        %474 = vmatpush1.xpose.msra.mxu0 0.0
        %475 = vmatprep.subr.mxu0 0.0
        %476 = vmatpush1.xpose.msra.mxu0 0.0
        %477 = vmatprep.subr.mxu0 0.0
        %478 = vmatpush1.xpose.msra.mxu0 0.0
        %479 = vmatprep.subr.mxu0 0.0
        %480 = vmatpush1.xpose.msra.mxu0 %v447
        %481 = vmatprep.subr.mxu0 0.0
        %482 = vmatpush2.xpose.msra.mxu0 0.0
        %483 = vmatprep.subr.mxu0 0.0
        %484 = vmatpush2.xpose.msra.mxu0 0.0
        %485 = vmatprep.subr.mxu0 0.0
        %486 = vmatpush2.xpose.msra.mxu0 0.0
        %487 = vmatprep.subr.mxu0 0.0
        %488 = vmatpush2.xpose.msra.mxu0 0.0
        %489 = vmatprep.subr.mxu0 0.0
        %490 = vmatpush2.xpose.msra.mxu0 0.0
        %491 = vmatprep.subr.mxu0 0.0
        %492 = vmatpush2.xpose.msra.mxu0 0.0
        %493 = vmatprep.subr.mxu0 0.0
        %494 = vmatpush2.xpose.msra.mxu0 0.0
        %495 = vmatprep.subr.mxu0 0.0
        %496 = vmatpush2.xpose.msra.mxu0 0.0
        %497 = vmatprep.subr.mxu0 0.0
        %498 = vmatpush2.xpose.msra.mxu0 0.0
        %499 = vmatprep.subr.mxu0 0.0
        %500 = vmatpush2.xpose.msra.mxu0 0.0
        %501 = vmatprep.subr.mxu0 0.0
        %502 = vmatpush2.xpose.msra.mxu0 0.0
        %503 = vmatprep.subr.mxu0 0.0
        %504 = vmatpush2.xpose.msra.mxu0 0.0
        %505 = vmatprep.subr.mxu0 0.0
        %506 = vmatpush2.xpose.msra.mxu0 0.0
        %507 = vmatprep.subr.mxu0 0.0
        %508 = vmatpush2.xpose.msra.mxu0 0.0
        %509 = vmatprep.subr.mxu0 0.0
        %510 = vmatpush2.xpose.msra.mxu0 0.0
        %511 = vmatprep.subr.mxu0 0.0
        %512 = vmatpush2.xpose.msra.mxu0 0.0
        %513 = vmatprep.mubr.f32.mxu0 0.0
        %514 = vmatmul.mubr.f32.gmra.mxu0 %v445
        %v515 = vpop.f32.mrf.mxu0
        %v516 = vadd.f32 0.0, %v515
        %v517 = vpop.f32.mrf.mxu0
        %518 = vdwg.mxu0
        %v519 = vmul.f32 %v516, 0.25
        %v520 = vsel %vm356, %v519, -inf
        %521 = vmax.xlane.f32.xlu0 %v520
        %v522 = vpop.xlane.xlu0 %521
        %v523 = vsub.f32 %v519, %v522
        %v524 = vmul.f32 %v523, 1.442695
        %v525 = vpow.pop %v524
        %v526 = vsel %vm356, %v525, 0.0
        %527 = vadd.xlane.f32.xlu0 %v526
        %v528 = vpop.xlane.xlu0 %527
        %v529 = vrcp.pop %v528
        %v530 = vmul.f32 %v525, %v529
        %532 = vrot.lane.b32.xlu0 %v275, 112
        %v533 = vpop.permute.xlu0 %532
        %v536 = vsel %vm356, %v530, 0
        %538 = vmatprep.subr.mxu0 0.0
        %539 = vmatpush1.msra.mxu0 0.0
        %540 = vmatprep.subr.mxu0 0.0
        %541 = vmatpush1.msra.mxu0 0.0
        %542 = vmatprep.subr.mxu0 0.0
        %543 = vmatpush1.msra.mxu0 0.0
        %544 = vmatprep.subr.mxu0 0.0
        %545 = vmatpush1.msra.mxu0 0.0
        %546 = vmatprep.subr.mxu0 0.0
        %547 = vmatpush1.msra.mxu0 0.0
        %548 = vmatprep.subr.mxu0 0.0
        %549 = vmatpush1.msra.mxu0 0.0
        %550 = vmatprep.subr.mxu0 0.0
        %551 = vmatpush1.msra.mxu0 0.0
        %552 = vmatprep.subr.mxu0 0.0
        %553 = vmatpush1.msra.mxu0 0.0
        %554 = vmatprep.subr.mxu0 0.0
        %555 = vmatpush1.msra.mxu0 0.0
        %556 = vmatprep.subr.mxu0 0.0
        %557 = vmatpush1.msra.mxu0 0.0
        %558 = vmatprep.subr.mxu0 0.0
        %559 = vmatpush1.msra.mxu0 0.0
        %560 = vmatprep.subr.mxu0 0.0
        %561 = vmatpush1.msra.mxu0 0.0
        %562 = vmatprep.subr.mxu0 0.0
        %563 = vmatpush1.msra.mxu0 0.0
        %564 = vmatprep.subr.mxu0 0.0
        %565 = vmatpush1.msra.mxu0 0.0
        %566 = vmatprep.subr.mxu0 0.0
        %567 = vmatpush1.msra.mxu0 0.0
        %568 = vmatprep.subr.mxu0 0.0
        %569 = vmatpush1.msra.mxu0 %v533
        %570 = vmatprep.subr.mxu0 0.0
        %571 = vmatpush2.msra.mxu0 0.0
        %572 = vmatprep.subr.mxu0 0.0
        %573 = vmatpush2.msra.mxu0 0.0
        %574 = vmatprep.subr.mxu0 0.0
        %575 = vmatpush2.msra.mxu0 0.0
        %576 = vmatprep.subr.mxu0 0.0
        %577 = vmatpush2.msra.mxu0 0.0
        %578 = vmatprep.subr.mxu0 0.0
        %579 = vmatpush2.msra.mxu0 0.0
        %580 = vmatprep.subr.mxu0 0.0
        %581 = vmatpush2.msra.mxu0 0.0
        %582 = vmatprep.subr.mxu0 0.0
        %583 = vmatpush2.msra.mxu0 0.0
        %584 = vmatprep.subr.mxu0 0.0
        %585 = vmatpush2.msra.mxu0 0.0
        %586 = vmatprep.subr.mxu0 0.0
        %587 = vmatpush2.msra.mxu0 0.0
        %588 = vmatprep.subr.mxu0 0.0
        %589 = vmatpush2.msra.mxu0 0.0
        %590 = vmatprep.subr.mxu0 0.0
        %591 = vmatpush2.msra.mxu0 0.0
        %592 = vmatprep.subr.mxu0 0.0
        %593 = vmatpush2.msra.mxu0 0.0
        %594 = vmatprep.subr.mxu0 0.0
        %595 = vmatpush2.msra.mxu0 0.0
        %596 = vmatprep.subr.mxu0 0.0
        %597 = vmatpush2.msra.mxu0 0.0
        %598 = vmatprep.subr.mxu0 0.0
        %599 = vmatpush2.msra.mxu0 0.0
        %600 = vmatprep.subr.mxu0 0.0
        %601 = vmatpush2.msra.mxu0 0.0
        %602 = vmatprep.mubr.f32.mxu0 0.0
        %603 = vmatmul.mubr.f32.gmra.mxu0 %v536
        %v604 = vpop.f32.mrf.mxu0
        %v605 = vadd.f32 0.0, %v604
        %v606 = vpop.f32.mrf.mxu0
        %607 = vdwg.mxu0
        %608 = vrot.lane.b32.xlu0 %v273, 96
        %v609 = vpop.permute.xlu0 %608
        %610 = vrot.lane.b32.xlu0 %v273, 32
        %v611 = vpop.permute.xlu0 %610
        %v612 = vsel %vm280, %v609, 0
        %v614 = vsel %vm280, %v611, 0
        %616 = vmatprep.subr.mxu0 0.0
        %617 = vmatpush1.xpose.msra.mxu0 0.0
        %618 = vmatprep.subr.mxu0 0.0
        %619 = vmatpush1.xpose.msra.mxu0 0.0
        %620 = vmatprep.subr.mxu0 0.0
        %621 = vmatpush1.xpose.msra.mxu0 0.0
        %622 = vmatprep.subr.mxu0 0.0
        %623 = vmatpush1.xpose.msra.mxu0 0.0
        %624 = vmatprep.subr.mxu0 0.0
        %625 = vmatpush1.xpose.msra.mxu0 0.0
        %626 = vmatprep.subr.mxu0 0.0
        %627 = vmatpush1.xpose.msra.mxu0 0.0
        %628 = vmatprep.subr.mxu0 0.0
        %629 = vmatpush1.xpose.msra.mxu0 0.0
        %630 = vmatprep.subr.mxu0 0.0
        %631 = vmatpush1.xpose.msra.mxu0 0.0
        %632 = vmatprep.subr.mxu0 0.0
        %633 = vmatpush1.xpose.msra.mxu0 0.0
        %634 = vmatprep.subr.mxu0 0.0
        %635 = vmatpush1.xpose.msra.mxu0 0.0
        %636 = vmatprep.subr.mxu0 0.0
        %637 = vmatpush1.xpose.msra.mxu0 0.0
        %638 = vmatprep.subr.mxu0 0.0
        %639 = vmatpush1.xpose.msra.mxu0 0.0
        %640 = vmatprep.subr.mxu0 0.0
        %641 = vmatpush1.xpose.msra.mxu0 0.0
        %642 = vmatprep.subr.mxu0 0.0
        %643 = vmatpush1.xpose.msra.mxu0 0.0
        %644 = vmatprep.subr.mxu0 0.0
        %645 = vmatpush1.xpose.msra.mxu0 0.0
        %646 = vmatprep.subr.mxu0 0.0
        %647 = vmatpush1.xpose.msra.mxu0 %v614
        %648 = vmatprep.subr.mxu0 0.0
        %649 = vmatpush2.xpose.msra.mxu0 0.0
        %650 = vmatprep.subr.mxu0 0.0
        %651 = vmatpush2.xpose.msra.mxu0 0.0
        %652 = vmatprep.subr.mxu0 0.0
        %653 = vmatpush2.xpose.msra.mxu0 0.0
        %654 = vmatprep.subr.mxu0 0.0
        %655 = vmatpush2.xpose.msra.mxu0 0.0
        %656 = vmatprep.subr.mxu0 0.0
        %657 = vmatpush2.xpose.msra.mxu0 0.0
        %658 = vmatprep.subr.mxu0 0.0
        %659 = vmatpush2.xpose.msra.mxu0 0.0
        %660 = vmatprep.subr.mxu0 0.0
        %661 = vmatpush2.xpose.msra.mxu0 0.0
        %662 = vmatprep.subr.mxu0 0.0
        %663 = vmatpush2.xpose.msra.mxu0 0.0
        %664 = vmatprep.subr.mxu0 0.0
        %665 = vmatpush2.xpose.msra.mxu0 0.0
        %666 = vmatprep.subr.mxu0 0.0
        %667 = vmatpush2.xpose.msra.mxu0 0.0
        %668 = vmatprep.subr.mxu0 0.0
        %669 = vmatpush2.xpose.msra.mxu0 0.0
        %670 = vmatprep.subr.mxu0 0.0
        %671 = vmatpush2.xpose.msra.mxu0 0.0
        %672 = vmatprep.subr.mxu0 0.0
        %673 = vmatpush2.xpose.msra.mxu0 0.0
        %674 = vmatprep.subr.mxu0 0.0
        %675 = vmatpush2.xpose.msra.mxu0 0.0
        %676 = vmatprep.subr.mxu0 0.0
        %677 = vmatpush2.xpose.msra.mxu0 0.0
        %678 = vmatprep.subr.mxu0 0.0
        %679 = vmatpush2.xpose.msra.mxu0 0.0
        %680 = vmatprep.mubr.f32.mxu0 0.0
        %681 = vmatmul.mubr.f32.gmra.mxu0 %v612
        %v682 = vpop.f32.mrf.mxu0
        %v683 = vadd.f32 0.0, %v682
        %v684 = vpop.f32.mrf.mxu0
        %685 = vdwg.mxu0
        %v686 = vmul.f32 %v683, 0.25
        %v687 = vsel %vm356, %v686, -inf
        %688 = vmax.xlane.f32.xlu0 %v687
        %v689 = vpop.xlane.xlu0 %688
        %v690 = vsub.f32 %v686, %v689
        %v691 = vmul.f32 %v690, 1.442695
        %v692 = vpow.pop %v691
        %v693 = vsel %vm356, %v692, 0.0
        %694 = vadd.xlane.f32.xlu0 %v693
        %v695 = vpop.xlane.xlu0 %694
        %v696 = vrcp.pop %v695
        %v697 = vmul.f32 %v692, %v696
        %698 = vrot.lane.b32.xlu0 %v275, 96
        %v699 = vpop.permute.xlu0 %698
        %v702 = vsel %vm356, %v697, 0
        %704 = vmatprep.subr.mxu0 0.0
        %705 = vmatpush1.msra.mxu0 0.0
        %706 = vmatprep.subr.mxu0 0.0
        %707 = vmatpush1.msra.mxu0 0.0
        %708 = vmatprep.subr.mxu0 0.0
        %709 = vmatpush1.msra.mxu0 0.0
        %710 = vmatprep.subr.mxu0 0.0
        %711 = vmatpush1.msra.mxu0 0.0
        %712 = vmatprep.subr.mxu0 0.0
        %713 = vmatpush1.msra.mxu0 0.0
        %714 = vmatprep.subr.mxu0 0.0
        %715 = vmatpush1.msra.mxu0 0.0
        %716 = vmatprep.subr.mxu0 0.0
        %717 = vmatpush1.msra.mxu0 0.0
        %718 = vmatprep.subr.mxu0 0.0
        %719 = vmatpush1.msra.mxu0 0.0
        %720 = vmatprep.subr.mxu0 0.0
        %721 = vmatpush1.msra.mxu0 0.0
        %722 = vmatprep.subr.mxu0 0.0
        %723 = vmatpush1.msra.mxu0 0.0
        %724 = vmatprep.subr.mxu0 0.0
        %725 = vmatpush1.msra.mxu0 0.0
        %726 = vmatprep.subr.mxu0 0.0
        %727 = vmatpush1.msra.mxu0 0.0
        %728 = vmatprep.subr.mxu0 0.0
        %729 = vmatpush1.msra.mxu0 0.0
        %730 = vmatprep.subr.mxu0 0.0
        %731 = vmatpush1.msra.mxu0 0.0
        %732 = vmatprep.subr.mxu0 0.0
        %733 = vmatpush1.msra.mxu0 0.0
        %734 = vmatprep.subr.mxu0 0.0
        %735 = vmatpush1.msra.mxu0 %v699
        %736 = vmatprep.subr.mxu0 0.0
        %737 = vmatpush2.msra.mxu0 0.0
        %738 = vmatprep.subr.mxu0 0.0
        %739 = vmatpush2.msra.mxu0 0.0
        %740 = vmatprep.subr.mxu0 0.0
        %741 = vmatpush2.msra.mxu0 0.0
        %742 = vmatprep.subr.mxu0 0.0
        %743 = vmatpush2.msra.mxu0 0.0
        %744 = vmatprep.subr.mxu0 0.0
        %745 = vmatpush2.msra.mxu0 0.0
        %746 = vmatprep.subr.mxu0 0.0
        %747 = vmatpush2.msra.mxu0 0.0
        %748 = vmatprep.subr.mxu0 0.0
        %749 = vmatpush2.msra.mxu0 0.0
        %750 = vmatprep.subr.mxu0 0.0
        %751 = vmatpush2.msra.mxu0 0.0
        %752 = vmatprep.subr.mxu0 0.0
        %753 = vmatpush2.msra.mxu0 0.0
        %754 = vmatprep.subr.mxu0 0.0
        %755 = vmatpush2.msra.mxu0 0.0
        %756 = vmatprep.subr.mxu0 0.0
        %757 = vmatpush2.msra.mxu0 0.0
        %758 = vmatprep.subr.mxu0 0.0
        %759 = vmatpush2.msra.mxu0 0.0
        %760 = vmatprep.subr.mxu0 0.0
        %761 = vmatpush2.msra.mxu0 0.0
        %762 = vmatprep.subr.mxu0 0.0
        %763 = vmatpush2.msra.mxu0 0.0
        %764 = vmatprep.subr.mxu0 0.0
        %765 = vmatpush2.msra.mxu0 0.0
        %766 = vmatprep.subr.mxu0 0.0
        %767 = vmatpush2.msra.mxu0 0.0
        %768 = vmatprep.mubr.f32.mxu0 0.0
        %769 = vmatmul.mubr.f32.gmra.mxu0 %v702
        %v770 = vpop.f32.mrf.mxu0
        %v771 = vadd.f32 0.0, %v770
        %v772 = vpop.f32.mrf.mxu0
        %773 = vdwg.mxu0
        %774 = vrot.lane.b32.xlu0 %v273, 80
        %v775 = vpop.permute.xlu0 %774
        %776 = vrot.lane.b32.xlu0 %v273, 16
        %v777 = vpop.permute.xlu0 %776
        %v778 = vsel %vm280, %v775, 0
        %v780 = vsel %vm280, %v777, 0
        %782 = vmatprep.subr.mxu0 0.0
        %783 = vmatpush1.xpose.msra.mxu0 0.0
        %784 = vmatprep.subr.mxu0 0.0
        %785 = vmatpush1.xpose.msra.mxu0 0.0
        %786 = vmatprep.subr.mxu0 0.0
        %787 = vmatpush1.xpose.msra.mxu0 0.0
        %788 = vmatprep.subr.mxu0 0.0
        %789 = vmatpush1.xpose.msra.mxu0 0.0
        %790 = vmatprep.subr.mxu0 0.0
        %791 = vmatpush1.xpose.msra.mxu0 0.0
        %792 = vmatprep.subr.mxu0 0.0
        %793 = vmatpush1.xpose.msra.mxu0 0.0
        %794 = vmatprep.subr.mxu0 0.0
        %795 = vmatpush1.xpose.msra.mxu0 0.0
        %796 = vmatprep.subr.mxu0 0.0
        %797 = vmatpush1.xpose.msra.mxu0 0.0
        %798 = vmatprep.subr.mxu0 0.0
        %799 = vmatpush1.xpose.msra.mxu0 0.0
        %800 = vmatprep.subr.mxu0 0.0
        %801 = vmatpush1.xpose.msra.mxu0 0.0
        %802 = vmatprep.subr.mxu0 0.0
        %803 = vmatpush1.xpose.msra.mxu0 0.0
        %804 = vmatprep.subr.mxu0 0.0
        %805 = vmatpush1.xpose.msra.mxu0 0.0
        %806 = vmatprep.subr.mxu0 0.0
        %807 = vmatpush1.xpose.msra.mxu0 0.0
        %808 = vmatprep.subr.mxu0 0.0
        %809 = vmatpush1.xpose.msra.mxu0 0.0
        %810 = vmatprep.subr.mxu0 0.0
        %811 = vmatpush1.xpose.msra.mxu0 0.0
        %812 = vmatprep.subr.mxu0 0.0
        %813 = vmatpush1.xpose.msra.mxu0 %v780
        %814 = vmatprep.subr.mxu0 0.0
        %815 = vmatpush2.xpose.msra.mxu0 0.0
        %816 = vmatprep.subr.mxu0 0.0
        %817 = vmatpush2.xpose.msra.mxu0 0.0
        %818 = vmatprep.subr.mxu0 0.0
        %819 = vmatpush2.xpose.msra.mxu0 0.0
        %820 = vmatprep.subr.mxu0 0.0
        %821 = vmatpush2.xpose.msra.mxu0 0.0
        %822 = vmatprep.subr.mxu0 0.0
        %823 = vmatpush2.xpose.msra.mxu0 0.0
        %824 = vmatprep.subr.mxu0 0.0
        %825 = vmatpush2.xpose.msra.mxu0 0.0
        %826 = vmatprep.subr.mxu0 0.0
        %827 = vmatpush2.xpose.msra.mxu0 0.0
        %828 = vmatprep.subr.mxu0 0.0
        %829 = vmatpush2.xpose.msra.mxu0 0.0
        %830 = vmatprep.subr.mxu0 0.0
        %831 = vmatpush2.xpose.msra.mxu0 0.0
        %832 = vmatprep.subr.mxu0 0.0
        %833 = vmatpush2.xpose.msra.mxu0 0.0
        %834 = vmatprep.subr.mxu0 0.0
        %835 = vmatpush2.xpose.msra.mxu0 0.0
        %836 = vmatprep.subr.mxu0 0.0
        %837 = vmatpush2.xpose.msra.mxu0 0.0
        %838 = vmatprep.subr.mxu0 0.0
        %839 = vmatpush2.xpose.msra.mxu0 0.0
        %840 = vmatprep.subr.mxu0 0.0
        %841 = vmatpush2.xpose.msra.mxu0 0.0
        %842 = vmatprep.subr.mxu0 0.0
        %843 = vmatpush2.xpose.msra.mxu0 0.0
        %844 = vmatprep.subr.mxu0 0.0
        %845 = vmatpush2.xpose.msra.mxu0 0.0
        %846 = vmatprep.mubr.f32.mxu0 0.0
        %847 = vmatmul.mubr.f32.gmra.mxu0 %v778
        %v848 = vpop.f32.mrf.mxu0
        %v849 = vadd.f32 0.0, %v848
        %v850 = vpop.f32.mrf.mxu0
        %851 = vdwg.mxu0
        %v852 = vmul.f32 %v849, 0.25
        %v853 = vsel %vm356, %v852, -inf
        %854 = vmax.xlane.f32.xlu0 %v853
        %v855 = vpop.xlane.xlu0 %854
        %v856 = vsub.f32 %v852, %v855
        %v857 = vmul.f32 %v856, 1.442695
        %v858 = vpow.pop %v857
        %v859 = vsel %vm356, %v858, 0.0
        %860 = vadd.xlane.f32.xlu0 %v859
        %v861 = vpop.xlane.xlu0 %860
        %v862 = vrcp.pop %v861
        %v863 = vmul.f32 %v858, %v862
        %864 = vrot.lane.b32.xlu0 %v275, 80
        %v865 = vpop.permute.xlu0 %864
        %v868 = vsel %vm356, %v863, 0
        %870 = vmatprep.subr.mxu0 0.0
        %871 = vmatpush1.msra.mxu0 0.0
        %872 = vmatprep.subr.mxu0 0.0
        %873 = vmatpush1.msra.mxu0 0.0
        %874 = vmatprep.subr.mxu0 0.0
        %875 = vmatpush1.msra.mxu0 0.0
        %876 = vmatprep.subr.mxu0 0.0
        %877 = vmatpush1.msra.mxu0 0.0
        %878 = vmatprep.subr.mxu0 0.0
        %879 = vmatpush1.msra.mxu0 0.0
        %880 = vmatprep.subr.mxu0 0.0
        %881 = vmatpush1.msra.mxu0 0.0
        %882 = vmatprep.subr.mxu0 0.0
        %883 = vmatpush1.msra.mxu0 0.0
        %884 = vmatprep.subr.mxu0 0.0
        %885 = vmatpush1.msra.mxu0 0.0
        %886 = vmatprep.subr.mxu0 0.0
        %887 = vmatpush1.msra.mxu0 0.0
        %888 = vmatprep.subr.mxu0 0.0
        %889 = vmatpush1.msra.mxu0 0.0
        %890 = vmatprep.subr.mxu0 0.0
        %891 = vmatpush1.msra.mxu0 0.0
        %892 = vmatprep.subr.mxu0 0.0
        %893 = vmatpush1.msra.mxu0 0.0
        %894 = vmatprep.subr.mxu0 0.0
        %895 = vmatpush1.msra.mxu0 0.0
        %896 = vmatprep.subr.mxu0 0.0
        %897 = vmatpush1.msra.mxu0 0.0
        %898 = vmatprep.subr.mxu0 0.0
        %899 = vmatpush1.msra.mxu0 0.0
        %900 = vmatprep.subr.mxu0 0.0
        %901 = vmatpush1.msra.mxu0 %v865
        %902 = vmatprep.subr.mxu0 0.0
        %903 = vmatpush2.msra.mxu0 0.0
        %904 = vmatprep.subr.mxu0 0.0
        %905 = vmatpush2.msra.mxu0 0.0
        %906 = vmatprep.subr.mxu0 0.0
        %907 = vmatpush2.msra.mxu0 0.0
        %908 = vmatprep.subr.mxu0 0.0
        %909 = vmatpush2.msra.mxu0 0.0
        %910 = vmatprep.subr.mxu0 0.0
        %911 = vmatpush2.msra.mxu0 0.0
        %912 = vmatprep.subr.mxu0 0.0
        %913 = vmatpush2.msra.mxu0 0.0
        %914 = vmatprep.subr.mxu0 0.0
        %915 = vmatpush2.msra.mxu0 0.0
        %916 = vmatprep.subr.mxu0 0.0
        %917 = vmatpush2.msra.mxu0 0.0
        %918 = vmatprep.subr.mxu0 0.0
        %919 = vmatpush2.msra.mxu0 0.0
        %920 = vmatprep.subr.mxu0 0.0
        %921 = vmatpush2.msra.mxu0 0.0
        %922 = vmatprep.subr.mxu0 0.0
        %923 = vmatpush2.msra.mxu0 0.0
        %924 = vmatprep.subr.mxu0 0.0
        %925 = vmatpush2.msra.mxu0 0.0
        %926 = vmatprep.subr.mxu0 0.0
        %927 = vmatpush2.msra.mxu0 0.0
        %928 = vmatprep.subr.mxu0 0.0
        %929 = vmatpush2.msra.mxu0 0.0
        %930 = vmatprep.subr.mxu0 0.0
        %931 = vmatpush2.msra.mxu0 0.0
        %932 = vmatprep.subr.mxu0 0.0
        %933 = vmatpush2.msra.mxu0 0.0
        %934 = vmatprep.mubr.f32.mxu0 0.0
        %935 = vmatmul.mubr.f32.gmra.mxu0 %v868
        %v936 = vpop.f32.mrf.mxu0
        %v937 = vadd.f32 0.0, %v936
        %v938 = vpop.f32.mrf.mxu0
        %939 = vdwg.mxu0
        %941 = vrot.lane.b32.xlu0 %v605, 16
        %v942 = vpop.permute.xlu0 %941
        %945 = vrot.lane.b32.xlu0 %v771, 32
        %v946 = vpop.permute.xlu0 %945
        %949 = vrot.lane.b32.xlu0 %v937, 48
        %v950 = vpop.permute.xlu0 %949
        %v952 = vsel %vm280, %v438, %v942
        %v953 = vsel %vm202, %v952, %v946
        %vm954 = vcmask 392192
        %v955 = vsel %vm954, %v953, %v950
        %v956 = vld [vmem:[%s2] sm:$0xff]
        %v957 = vld [vmem:[%s2 + $0x8] sm:$0xff]
        %v958 = vld [vmem:[%s2 + $0x10] sm:$0xff]
        %v959 = vld [vmem:[%s2 + $0x18] sm:$0xff]
        %v960 = vld [vmem:[%s2 + $0x20] sm:$0xff]
        %v961 = vld [vmem:[%s2 + $0x28] sm:$0xff]
        %v962 = vld [vmem:[%s2 + $0x30] sm:$0xff]
        %v963 = vld [vmem:[%s2 + $0x38] sm:$0xff]
        %v964 = vld [vmem:[%s3] sm:$0x1]
        %v966 = vlaneseq
        %v967 = vshrl.u32 %v966, 7
        %v968 = vsub.s32 0, %v967
        %v969 = vrot.slane %v964, %v968
        %vm971 = vcmask 523264
        %v973 = vsel %vm971, %v955, 0
        %975 = vmatprep.subr.mxu0 0.0
        %976 = vmatpush1.msra.mxu0 0.0
        %977 = vmatprep.subr.mxu0 0.0
        %978 = vmatpush1.msra.mxu0 0.0
        %979 = vmatprep.subr.mxu0 0.0
        %980 = vmatpush1.msra.mxu0 0.0
        %981 = vmatprep.subr.mxu0 0.0
        %982 = vmatpush1.msra.mxu0 0.0
        %983 = vmatprep.subr.mxu0 0.0
        %984 = vmatpush1.msra.mxu0 0.0
        %985 = vmatprep.subr.mxu0 0.0
        %986 = vmatpush1.msra.mxu0 0.0
        %987 = vmatprep.subr.mxu0 0.0
        %988 = vmatpush1.msra.mxu0 0.0
        %989 = vmatprep.subr.mxu0 0.0
        %990 = vmatpush1.msra.mxu0 0.0
        %991 = vmatprep.subr.mxu0 0.0
        %992 = vmatpush1.msra.mxu0 %v963
        %993 = vmatprep.subr.mxu0 0.0
        %994 = vmatpush1.msra.mxu0 %v962
        %995 = vmatprep.subr.mxu0 0.0
        %996 = vmatpush1.msra.mxu0 %v961
        %997 = vmatprep.subr.mxu0 0.0
        %998 = vmatpush1.msra.mxu0 %v960
        %999 = vmatprep.subr.mxu0 0.0
        %1000 = vmatpush1.msra.mxu0 %v959
        %1001 = vmatprep.subr.mxu0 0.0
        %1002 = vmatpush1.msra.mxu0 %v958
        %1003 = vmatprep.subr.mxu0 0.0
        %1004 = vmatpush1.msra.mxu0 %v957
        %1005 = vmatprep.subr.mxu0 0.0
        %1006 = vmatpush1.msra.mxu0 %v956
        %1007 = vmatprep.subr.mxu0 0.0
        %1008 = vmatpush2.msra.mxu0 0.0
        %1009 = vmatprep.subr.mxu0 0.0
        %1010 = vmatpush2.msra.mxu0 0.0
        %1011 = vmatprep.subr.mxu0 0.0
        %1012 = vmatpush2.msra.mxu0 0.0
        %1013 = vmatprep.subr.mxu0 0.0
        %1014 = vmatpush2.msra.mxu0 0.0
        %1015 = vmatprep.subr.mxu0 0.0
        %1016 = vmatpush2.msra.mxu0 0.0
        %1017 = vmatprep.subr.mxu0 0.0
        %1018 = vmatpush2.msra.mxu0 0.0
        %1019 = vmatprep.subr.mxu0 0.0
        %1020 = vmatpush2.msra.mxu0 0.0
        %1021 = vmatprep.subr.mxu0 0.0
        %1022 = vmatpush2.msra.mxu0 0.0
        %1023 = vmatprep.subr.mxu0 0.0
        %1024 = vmatpush2.msra.mxu0 0.0
        %1025 = vmatprep.subr.mxu0 0.0
        %1026 = vmatpush2.msra.mxu0 0.0
        %1027 = vmatprep.subr.mxu0 0.0
        %1028 = vmatpush2.msra.mxu0 0.0
        %1029 = vmatprep.subr.mxu0 0.0
        %1030 = vmatpush2.msra.mxu0 0.0
        %1031 = vmatprep.subr.mxu0 0.0
        %1032 = vmatpush2.msra.mxu0 0.0
        %1033 = vmatprep.subr.mxu0 0.0
        %1034 = vmatpush2.msra.mxu0 0.0
        %1035 = vmatprep.subr.mxu0 0.0
        %1036 = vmatpush2.msra.mxu0 0.0
        %1037 = vmatprep.subr.mxu0 0.0
        %1038 = vmatpush2.msra.mxu0 0.0
        %1039 = vmatprep.mubr.f32.mxu0 0.0
        %1040 = vmatmul.mubr.f32.gmra.mxu0 %v973
        %v1041 = vpop.f32.mrf.mxu0
        %v1042 = vadd.f32 %v969, %v1041
        %v1043 = vpop.f32.mrf.mxu0
        %1044 = vdwg.mxu0
        %1045 = vst.msk [vmem:[%s188] sm:$0xff] %vm202, %v1042
        %s1046 = sand.u32 %s115, 1
        %s1047 = scalar_lea.sflag [#allocation3], %s1046
        %s1048 = sand.u32 %s115, 1
        %s1049 = smul.addr %s1048, 8
        %s1050 = scalar_lea.vmem [#allocation2], %s1049
        // Predicated region
        $region37: #{tpu_custom_call.1} parent=35 // pred_check
          %p1051 = pneg %p125
        $region38: #{tpu_custom_call.1} parent=35 // pred_check_branch
          %1053 = sbr.rel (%p1051) target = $region40
        $region39: #{tpu_custom_call.1} parent=35 // pred_region
          %s1055 = ssub.s32 128, 128
          %1056 = vsyncadd %s1047, %s1055
          %s1057 = smul.addr %s18, 128
          %s1058 = scalar_lea.hbm %s4, %s1057
          %s1060 = sshll.u32 %s1050, 4
          %s1061 = int_to_ptr.vmem [resolvable:$true] %s1060
          %1063 = dma.vmem_to_hbm [thread:$0]  %s1061, 128, %s1058, %s1047
        $region40: #{tpu_custom_call.1} parent=35 // pred_fallthru
          _
      $region36: #{tpu_custom_call.1} parent=5 // pred_fallthru
        _
      %p1064 = scmp.le.s32.totalorder 2, %s13
      // Predicated region
      $region41: #{tpu_custom_call.1} parent=5 // pred_check
        %p1065 = pneg %p1064
      $region42: #{tpu_custom_call.1} parent=5 // pred_check_branch
        %1067 = sbr.rel (%p1065) target = $region44
      $region43: #{tpu_custom_call.1} parent=5 // pred_region
        %s1068 = ssub.s32 %s13, 2
        // Predicated region
        $region45: #{tpu_custom_call.1} parent=43 // pred_check
          %p1069 = pneg %p131
        $region46: #{tpu_custom_call.1} parent=43 // pred_check_branch
          %1071 = sbr.rel (%p1069) target = $region48
        $region47: #{tpu_custom_call.1} parent=43 // pred_region
          %s1072 = sand.u32 %s116, 1
          %s1073 = scalar_lea.sflag [#allocation3], %s1072
          %s1074 = sand.u32 %s116, 1
          %s1075 = smul.addr %s1074, 8
          %s1076 = scalar_lea.vmem [#allocation2], %s1075
          %1077 = dma.done %s1073, 128
        $region48: #{tpu_custom_call.1} parent=43 // pred_fallthru
          _
      $region44: #{tpu_custom_call.1} parent=5 // pred_fallthru
        _
    $region6: #{tpu_custom_call.1} parent=1 // loop_footer
      %s17 = sadd.s32 1, %s13
    $region7: #{tpu_custom_call.1} parent=1 // loop_footer_branch
      %12 = sbr.rel target = $region3
    $region8: #{tpu_custom_call.1} parent=1 // loop_exit
      _
    %1078 = vsyncpa [#allocation3], 1
    %s1079 = scalar_lea.sflag [#allocation3], 1
    %1080 = vsyncpa %s1079, 1

</llo_original>
